<compile_context>
chip_gen: v7x
topology: tpu7x:2x2x1
jax: 0.10.0
libtpu: 0.0.40
codegen_flags: <defaults>
</compile_context>

<pallas_src>
import functools

import jax
import jax.numpy as jnp
from jax import lax
from jax.experimental import pallas as pl
from jax.experimental.pallas import tpu as pltpu


def _decoder_attn_kernel(*refs, weighted, return_attn, compute_dtype):
    # refs = (dec, enc, [w_attn^T], w_ctx, w_q, bias, out, [attn]) — the
    # optional entries are present only when weighted / return_attn.
    it = iter(refs)
    dec_ref = next(it)
    enc_ref = next(it)
    wattn_ref = next(it) if weighted else None
    wc_ref = next(it)
    wq_ref = next(it)
    b_ref = next(it)
    out_ref = next(it)
    attn_ref = next(it) if return_attn else None

    dec = dec_ref[0]                          # (tq, H)
    enc = enc_ref[0].astype(compute_dtype)    # (Te, H) in MXU operand dtype

    if weighted:
        # attn_weight (bias-free Linear): weight pre-transposed in the wrapper,
        # so this is a plain x @ W with f32 accumulation.
        q = lax.dot_general(
            dec.astype(compute_dtype), wattn_ref[...],
            dimension_numbers=(((1,), (0,)), ((), ())),
            preferred_element_type=jnp.float32).astype(compute_dtype)
    else:
        q = dec.astype(compute_dtype)

    # scores (tq, Te): contract last axes of q and enc — no materialized enc.T.
    scores = lax.dot_general(
        q, enc,
        dimension_numbers=(((1,), (1,)), ((), ())),
        preferred_element_type=jnp.float32)

    # Softmax over the encoder axis (dim=2 in PyTorch), max-stabilized.
    # Exact normalization (previous approx reciprocal broke the tolerance);
    # an approx reciprocal + one Newton step would also be acceptable here.
    m = jnp.max(scores, axis=-1, keepdims=True)
    p = jnp.exp(scores - m)
    l = jnp.sum(p, axis=-1, keepdims=True)
    attn = p / l

    # context (tq, H) = attn @ enc, operands in compute_dtype, f32 accumulate.
    context = lax.dot_general(
        attn.astype(compute_dtype), enc,
        dimension_numbers=(((1,), (0,)), ((), ())),
        preferred_element_type=jnp.float32)

    # linear_output on cat((context, q), -1) without materializing the concat:
    # combined @ W_out.T == context @ Wc + q @ Wq (weights split once in wrapper).
    y = lax.dot_general(
        context.astype(compute_dtype), wc_ref[...],
        dimension_numbers=(((1,), (0,)), ((), ())),
        preferred_element_type=jnp.float32)
    y = y + lax.dot_general(
        q, wq_ref[...],
        dimension_numbers=(((1,), (0,)), ((), ())),
        preferred_element_type=jnp.float32)
    y = jnp.tanh(y + b_ref[0])

    out_ref[0] = y.astype(out_ref.dtype)
    if return_attn:
        attn_ref[0] = attn.astype(attn_ref.dtype)


def decoder_attention(decoder_out, encoder_out, w_attn, w_out, b_out, *,
                      weighted=True, return_attn=True, block_q=256,
                      matmul_dtype=None, attn_dtype=None):
    """Pallas DecoderAttention forward.

    decoder_out: (B, Td, H)   encoder_out: (B, Te, H)
    w_attn:  (H, H)   PyTorch Linear weight (out_features, in_features); only
                      read when weighted=True (may be None otherwise).
    w_out:   (H, 2H)  PyTorch Linear weight
    b_out:   (H,)
    matmul_dtype: MXU operand dtype. Defaults to bf16 for bf16 inputs and f32
                  for f32 inputs; pass jnp.bfloat16 with f32 inputs for the
                  MXU-native fast path (accumulation is always f32).
    attn_dtype / return_attn: control the (B, Td, Te) attention writeback.
    Returns (output (B, Td, H), attn (B, Td, Te)) or just output.
    """
    B, Td, H = decoder_out.shape
    Be, Te, He = encoder_out.shape
    assert He == H and Be == B, "Size mismatch"
    assert w_out.shape == (H, 2 * H) and b_out.shape == (H,)

    in_dtype = decoder_out.dtype
    if matmul_dtype is None:
        compute_dtype = jnp.bfloat16 if in_dtype == jnp.bfloat16 else jnp.float32
    else:
        compute_dtype = jnp.dtype(matmul_dtype)
    out_dtype = in_dtype
    attn_out_dtype = jnp.dtype(attn_dtype) if attn_dtype is not None else in_dtype

    # --- one-time layout plumbing in the wrapper (not per grid step) --------
    w_out_t = jnp.asarray(w_out).T                      # (2H, H)
    w_ctx = w_out_t[:H].astype(compute_dtype)           # context half
    w_q = w_out_t[H:].astype(compute_dtype)             # q half
    b2d = jnp.asarray(b_out).reshape(1, H).astype(jnp.float32)
    if weighted:
        w_attn_t = jnp.asarray(w_attn).T.astype(compute_dtype)

    in_bytes = jnp.dtype(in_dtype).itemsize
    cd_bytes = jnp.dtype(compute_dtype).itemsize
    out_bytes = jnp.dtype(out_dtype).itemsize
    attn_bytes = jnp.dtype(attn_out_dtype).itemsize
    n_weights = 3 if weighted else 2

    def footprint(tq):
        f = 2 * tq * H * in_bytes                       # decoder tile (x2 buffers)
        f += (1 if B == 1 else 2) * Te * H * in_bytes   # encoder block
        f += n_weights * H * H * cd_bytes + H * 4       # resident weights + bias
        f += 2 * tq * H * out_bytes                     # output tile (x2)
        if return_attn:
            f += 2 * tq * Te * attn_bytes               # attn tile (x2)
        f += 3 * tq * Te * 4                            # scores / p / attn (f32)
        f += 3 * tq * H * 4                             # q / context / y live values
        return f

    try:
        vmem_cap = int(pltpu.get_tpu_info().vmem_capacity_bytes)
    except Exception:  # no TPU visible (e.g. interpret mode on CPU host)
        vmem_cap = 64 * 1024 * 1024
    budget = vmem_cap * 7 // 8       # leave headroom for Mosaic internal scratch

    # --- Td tiling: largest divisor of Td that packs well and fits VMEM -----
    pack = 16 if in_dtype == jnp.bfloat16 else 8
    limit = min(block_q, Td)
    if B == 1 and Td >= 2 * pack:
        # v7x has 2 TensorCores per chip; keep >= 2 grid steps when B == 1.
        limit = min(limit, max(pack, Td // 2))
    divisors = sorted((d for d in range(1, Td + 1) if Td % d == 0 and d <= limit),
                      reverse=True)
    tq = None
    for d in divisors:
        if d % pack == 0 and footprint(d) <= budget:
            tq = d
            break
    if tq is None:
        for d in divisors:
            if footprint(d) <= budget:
                tq = d
                break
    if tq is None:
        # TODO(synk): for extreme Te even a minimal q-tile exceeds VMEM; add an
        # innermost "arbitrary" Te grid axis with online-softmax accumulation
        # (needs a second normalization pass because the dense attn matrix is
        # a kernel output).
        tq = divisors[-1]
    grid = (B, Td // tq)

    # --- BlockSpecs ----------------------------------------------------------
    def _resident_spec(shape, index_map):
        # Grid-invariant blocks: single-buffer them (no pipelining benefit,
        # halves their VMEM footprint). Fall back gracefully if this JAX
        # version lacks pipeline_mode / Buffered.
        buffered = getattr(pl, "Buffered", None)
        if buffered is not None:
            try:
                return pl.BlockSpec(shape, index_map, pipeline_mode=buffered(1))
            except TypeError:
                pass
        return pl.BlockSpec(shape, index_map)

    dec_spec = pl.BlockSpec((1, tq, H), lambda b, i: (b, i, 0))
    enc_index = lambda b, i: (b, 0, 0)
    enc_spec = (_resident_spec((1, Te, H), enc_index) if B == 1
                else pl.BlockSpec((1, Te, H), enc_index))

    in_specs = [dec_spec, enc_spec]
    inputs = [decoder_out, encoder_out]
    if weighted:
        in_specs.append(_resident_spec((H, H), lambda b, i: (0, 0)))
        inputs.append(w_attn_t)
    in_specs += [_resident_spec((H, H), lambda b, i: (0, 0)),
                 _resident_spec((H, H), lambda b, i: (0, 0)),
                 _resident_spec((1, H), lambda b, i: (0, 0))]
    inputs += [w_ctx, w_q, b2d]

    out_spec_y = pl.BlockSpec((1, tq, H), lambda b, i: (b, i, 0))
    if return_attn:
        out_shape = (jax.ShapeDtypeStruct((B, Td, H), out_dtype),
                     jax.ShapeDtypeStruct((B, Td, Te), attn_out_dtype))
        out_specs = (out_spec_y,
                     pl.BlockSpec((1, tq, Te), lambda b, i: (b, i, 0)))
    else:
        out_shape = jax.ShapeDtypeStruct((B, Td, H), out_dtype)
        out_specs = out_spec_y

    vmem_limit = int(min(vmem_cap,
                         max(32 * 1024 * 1024, footprint(tq) * 3 // 2)))

    kernel = functools.partial(_decoder_attn_kernel, weighted=weighted,
                               return_attn=return_attn,
                               compute_dtype=compute_dtype)

    grid_spec = pltpu.PrefetchScalarGridSpec(
        num_scalar_prefetch=0,
        grid=grid,
        in_specs=in_specs,
        out_specs=out_specs,
    )

    return pl.pallas_call(
        kernel,
        out_shape=out_shape,
        grid_spec=grid_spec,
        compiler_params=pltpu.CompilerParams(
            dimension_semantics=("parallel", "parallel"),
            vmem_limit_bytes=vmem_limit),
    )(*inputs)


def decoder_attention_ref(decoder_out, encoder_out, w_attn, w_out, b_out,
                          *, weighted=True):
    """Pure-JAX reference mirroring the PyTorch forward (f32-exact matmuls)."""
    P = jax.lax.Precision.HIGHEST
    q = decoder_out
    if weighted:
        q = jnp.einsum('btd,hd->bth', q, w_attn, precision=P)
    scores = jnp.einsum('btd,bsd->bts', q, encoder_out, precision=P)
    attn = jax.nn.softmax(scores, axis=2)
    context = jnp.einsum('bts,bsd->btd', attn, encoder_out, precision=P)
    combined = jnp.concatenate([context, q], axis=2)
    out = jnp.tanh(jnp.einsum('btk,hk->bth', combined, w_out, precision=P) + b_out)
    return out, attn


if __name__ == "__main__":
    # Lane-dense demo shapes: H and Te are multiples of 128 (unmasked stores,
    # full MXU width); still small.
    B, Td, Te, H = 2, 16, 128, 128
    key = jax.random.PRNGKey(0)
    k1, k2, k3, k4, k5 = jax.random.split(key, 5)

    decoder_out = jax.random.normal(k1, (B, Td, H), dtype=jnp.float32)
    encoder_out = jax.random.normal(k2, (B, Te, H), dtype=jnp.float32)
    w_attn = jax.random.normal(k3, (H, H), dtype=jnp.float32) * (1.0 / H ** 0.5)
    w_out = jax.random.normal(k4, (H, 2 * H), dtype=jnp.float32) * (1.0 / (2 * H) ** 0.5)
    b_out = jax.random.normal(k5, (H,), dtype=jnp.float32) * 0.01

    # --- weighted path, f32 inputs (f32 MXU operands by default) ------------
    out, attn = decoder_attention(decoder_out, encoder_out, w_attn, w_out,
                                  b_out, weighted=True)
    jax.block_until_ready((out, attn))
    out_ref, attn_ref = decoder_attention_ref(decoder_out, encoder_out,
                                              w_attn, w_out, b_out,
                                              weighted=True)
    assert jnp.allclose(out, out_ref, atol=2e-3, rtol=2e-3), "weighted out mismatch"
    assert jnp.allclose(attn, attn_ref, atol=2e-3, rtol=2e-3), "weighted attn mismatch"

    # --- unweighted path (no attn_weight input is shipped at all) -----------
    out_u, attn_u = decoder_attention(decoder_out, encoder_out, None, w_out,
                                      b_out, weighted=False)
    jax.block_until_ready((out_u, attn_u))
    out_u_ref, attn_u_ref = decoder_attention_ref(decoder_out, encoder_out,
                                                  w_attn, w_out, b_out,
                                                  weighted=False)
    assert jnp.allclose(out_u, out_u_ref, atol=2e-3, rtol=2e-3), "unweighted out mismatch"
    assert jnp.allclose(attn_u, attn_u_ref, atol=2e-3, rtol=2e-3), "unweighted attn mismatch"

    # --- bf16 inputs -> bf16 MXU operands (native path on v5e/v6e/v7x) ------
    dec_bf = decoder_out.astype(jnp.bfloat16)
    enc_bf = encoder_out.astype(jnp.bfloat16)
    wat_bf = w_attn.astype(jnp.bfloat16)
    wo_bf = w_out.astype(jnp.bfloat16)
    bo_bf = b_out.astype(jnp.bfloat16)
    out_b, attn_b = decoder_attention(dec_bf, enc_bf, wat_bf, wo_bf, bo_bf,
                                      weighted=True)
    jax.block_until_ready((out_b, attn_b))
    out_b_ref, attn_b_ref = decoder_attention_ref(
        dec_bf.astype(jnp.float32), enc_bf.astype(jnp.float32),
        wat_bf.astype(jnp.float32), wo_bf.astype(jnp.float32),
        bo_bf.astype(jnp.float32), weighted=True)
    # bf16 operand / bf16 storage tolerance (~2^-9 per rounding).
    assert jnp.allclose(out_b.astype(jnp.float32), out_b_ref, atol=5e-2, rtol=5e-2)
    assert jnp.allclose(attn_b.astype(jnp.float32), attn_b_ref, atol=5e-2, rtol=5e-2)

    print("KERNEL_OK")
</pallas_src>

<mosaic_0001>
module attributes {stable_mosaic.version = 11 : i64} {
  func.func @_decoder_attn_kernel(%arg0: i32, %arg1: i32, %arg2: memref<1x16x128xf32, #tpu.memory_space<vmem>>, %arg3: memref<1x128x128xf32, #tpu.memory_space<vmem>>, %arg4: memref<128x128xf32, #tpu.memory_space<vmem>>, %arg5: memref<128x128xf32, #tpu.memory_space<vmem>>, %arg6: memref<128x128xf32, #tpu.memory_space<vmem>>, %arg7: memref<1x128xf32, #tpu.memory_space<vmem>>, %arg8: memref<1x16x128xf32, #tpu.memory_space<vmem>>, %arg9: memref<1x16x128xf32, #tpu.memory_space<vmem>>) attributes {dimension_semantics = [#tpu.dimension_semantics<parallel>, #tpu.dimension_semantics<parallel>], iteration_bounds = array<i64: 2, 1>, scalar_prefetch = 0 : i64, scratch_operands = 0 : i64, tpu.core_type = #tpu.core_type<tc>, window_params = [{transform_indices = @transform_0, window_bounds = array<i64: 1, 16, 128>}, {transform_indices = @transform_1, window_bounds = array<i64: 1, 128, 128>}, {pipeline_mode = #tpu.pipeline_mode<synchronous>, transform_indices = @transform_2, window_bounds = array<i64: 128, 128>}, {pipeline_mode = #tpu.pipeline_mode<synchronous>, transform_indices = @transform_3, window_bounds = array<i64: 128, 128>}, {pipeline_mode = #tpu.pipeline_mode<synchronous>, transform_indices = @transform_4, window_bounds = array<i64: 128, 128>}, {pipeline_mode = #tpu.pipeline_mode<synchronous>, transform_indices = @transform_5, window_bounds = array<i64: 1, 128>}, {transform_indices = @transform_6, window_bounds = array<i64: 1, 16, 128>}, {transform_indices = @transform_7, window_bounds = array<i64: 1, 16, 128>}]} {
    %c0 = arith.constant 0 : index
    %c0_0 = arith.constant 0 : index
    %c0_1 = arith.constant 0 : index
    %0 = vector.load %arg2[%c0, %c0_0, %c0_1] : memref<1x16x128xf32, #tpu.memory_space<vmem>>, vector<1x16x128xf32>
    %1 = vector.shape_cast %0 : vector<1x16x128xf32> to vector<16x128xf32>
    %c0_2 = arith.constant 0 : index
    %c0_3 = arith.constant 0 : index
    %c0_4 = arith.constant 0 : index
    %2 = vector.load %arg3[%c0_2, %c0_3, %c0_4] : memref<1x128x128xf32, #tpu.memory_space<vmem>>, vector<1x128x128xf32>
    %3 = vector.shape_cast %2 : vector<1x128x128xf32> to vector<128x128xf32>
    %c0_5 = arith.constant 0 : index
    %c0_6 = arith.constant 0 : index
    %4 = vector.load %arg4[%c0_5, %c0_6] : memref<128x128xf32, #tpu.memory_space<vmem>>, vector<128x128xf32>
    %cst = arith.constant dense<0.000000e+00> : vector<16x128xf32>
    %5 = tpu.matmul %1, %4, %cst {dimension_numbers = #tpu.dot_dimension_numbers<[1], [0], [0], [1], [0, 0, 1, 1], [], []>} : vector<16x128xf32>, vector<128x128xf32>, vector<16x128xf32> -> vector<16x128xf32>
    %cst_7 = arith.constant dense<0.000000e+00> : vector<16x128xf32>
    %6 = tpu.matmul %5, %3, %cst_7 {dimension_numbers = #tpu.dot_dimension_numbers<[1], [1], [0], [0], [0, 0, 1, 0], [], []>} : vector<16x128xf32>, vector<128x128xf32>, vector<16x128xf32> -> vector<16x128xf32>
    %cst_8 = arith.constant dense<0xFF800000> : vector<16xf32>
    %7 = vector.multi_reduction <maximumf>, %6, %cst_8 [1] : vector<16x128xf32> to vector<16xf32>
    %8 = vector.shape_cast %7 : vector<16xf32> to vector<16x1xf32>
    %9 = vector.broadcast %8 : vector<16x1xf32> to vector<16x128xf32>
    %10 = arith.subf %6, %9 : vector<16x128xf32>
    %11 = math.exp %10 : vector<16x128xf32>
    %cst_9 = arith.constant dense<0.000000e+00> : vector<16xf32>
    %12 = vector.multi_reduction <add>, %11, %cst_9 [1] : vector<16x128xf32> to vector<16xf32>
    %13 = vector.shape_cast %12 : vector<16xf32> to vector<16x1xf32>
    %14 = vector.broadcast %13 : vector<16x1xf32> to vector<16x128xf32>
    %15 = arith.divf %11, %14 : vector<16x128xf32>
    %cst_10 = arith.constant dense<0.000000e+00> : vector<16x128xf32>
    %16 = tpu.matmul %15, %3, %cst_10 {dimension_numbers = #tpu.dot_dimension_numbers<[1], [0], [0], [1], [0, 0, 1, 1], [], []>} : vector<16x128xf32>, vector<128x128xf32>, vector<16x128xf32> -> vector<16x128xf32>
    %c0_11 = arith.constant 0 : index
    %c0_12 = arith.constant 0 : index
    %17 = vector.load %arg5[%c0_11, %c0_12] : memref<128x128xf32, #tpu.memory_space<vmem>>, vector<128x128xf32>
    %cst_13 = arith.constant dense<0.000000e+00> : vector<16x128xf32>
    %18 = tpu.matmul %16, %17, %cst_13 {dimension_numbers = #tpu.dot_dimension_numbers<[1], [0], [0], [1], [0, 0, 1, 1], [], []>} : vector<16x128xf32>, vector<128x128xf32>, vector<16x128xf32> -> vector<16x128xf32>
    %c0_14 = arith.constant 0 : index
    %c0_15 = arith.constant 0 : index
    %19 = vector.load %arg6[%c0_14, %c0_15] : memref<128x128xf32, #tpu.memory_space<vmem>>, vector<128x128xf32>
    %cst_16 = arith.constant dense<0.000000e+00> : vector<16x128xf32>
    %20 = tpu.matmul %5, %19, %cst_16 {dimension_numbers = #tpu.dot_dimension_numbers<[1], [0], [0], [1], [0, 0, 1, 1], [], []>} : vector<16x128xf32>, vector<128x128xf32>, vector<16x128xf32> -> vector<16x128xf32>
    %21 = arith.addf %18, %20 : vector<16x128xf32>
    %c0_17 = arith.constant 0 : index
    %c0_18 = arith.constant 0 : index
    %22 = vector.load %arg7[%c0_17, %c0_18] : memref<1x128xf32, #tpu.memory_space<vmem>>, vector<1x128xf32>
    %23 = vector.shape_cast %22 : vector<1x128xf32> to vector<128xf32>
    %24 = vector.shape_cast %23 : vector<128xf32> to vector<1x128xf32>
    %25 = vector.broadcast %24 : vector<1x128xf32> to vector<16x128xf32>
    %26 = arith.addf %21, %25 : vector<16x128xf32>
    %27 = math.tanh %26 : vector<16x128xf32>
    %c0_19 = arith.constant 0 : index
    %c0_20 = arith.constant 0 : index
    %c0_21 = arith.constant 0 : index
    %28 = vector.load %arg8[%c0_19, %c0_20, %c0_21] : memref<1x16x128xf32, #tpu.memory_space<vmem>>, vector<1x16x128xf32>
    %29 = vector.shape_cast %28 : vector<1x16x128xf32> to vector<16x128xf32>
    %30 = vector.shape_cast %27 : vector<16x128xf32> to vector<1x16x128xf32>
    tpu.vector_store %arg8[%c0_19, %c0_20, %c0_21], %30 {strides = array<i32>} : memref<1x16x128xf32, #tpu.memory_space<vmem>>, vector<1x16x128xf32>,
    %c0_22 = arith.constant 0 : index
    %c0_23 = arith.constant 0 : index
    %c0_24 = arith.constant 0 : index
    %31 = vector.load %arg9[%c0_22, %c0_23, %c0_24] : memref<1x16x128xf32, #tpu.memory_space<vmem>>, vector<1x16x128xf32>
    %32 = vector.shape_cast %31 : vector<1x16x128xf32> to vector<16x128xf32>
    %33 = vector.shape_cast %15 : vector<16x128xf32> to vector<1x16x128xf32>
    tpu.vector_store %arg9[%c0_22, %c0_23, %c0_24], %33 {strides = array<i32>} : memref<1x16x128xf32, #tpu.memory_space<vmem>>, vector<1x16x128xf32>,
    return
  }
  func.func @transform_0(%arg0: i32, %arg1: i32) -> (i32, i32, i32) {
    %c0_i32 = arith.constant 0 : i32
    %c0_i32_0 = arith.constant 0 : i32
    return %arg0, %arg1, %c0_i32 : i32, i32, i32
  }
  func.func @transform_1(%arg0: i32, %arg1: i32) -> (i32, i32, i32) {
    %c0_i32 = arith.constant 0 : i32
    %c0_i32_0 = arith.constant 0 : i32
    %c0_i32_1 = arith.constant 0 : i32
    return %arg0, %c0_i32, %c0_i32_0 : i32, i32, i32
  }
  func.func @transform_2(%arg0: i32, %arg1: i32) -> (i32, i32) {
    %c0_i32 = arith.constant 0 : i32
    %c0_i32_0 = arith.constant 0 : i32
    %c0_i32_1 = arith.constant 0 : i32
    return %c0_i32, %c0_i32_0 : i32, i32
  }
  func.func @transform_3(%arg0: i32, %arg1: i32) -> (i32, i32) {
    %c0_i32 = arith.constant 0 : i32
    %c0_i32_0 = arith.constant 0 : i32
    %c0_i32_1 = arith.constant 0 : i32
    return %c0_i32, %c0_i32_0 : i32, i32
  }
  func.func @transform_4(%arg0: i32, %arg1: i32) -> (i32, i32) {
    %c0_i32 = arith.constant 0 : i32
    %c0_i32_0 = arith.constant 0 : i32
    %c0_i32_1 = arith.constant 0 : i32
    return %c0_i32, %c0_i32_0 : i32, i32
  }
  func.func @transform_5(%arg0: i32, %arg1: i32) -> (i32, i32) {
    %c0_i32 = arith.constant 0 : i32
    %c0_i32_0 = arith.constant 0 : i32
    %c0_i32_1 = arith.constant 0 : i32
    return %c0_i32, %c0_i32_0 : i32, i32
  }
  func.func @transform_6(%arg0: i32, %arg1: i32) -> (i32, i32, i32) {
    %c0_i32 = arith.constant 0 : i32
    %c0_i32_0 = arith.constant 0 : i32
    return %arg0, %arg1, %c0_i32 : i32, i32, i32
  }
  func.func @transform_7(%arg0: i32, %arg1: i32) -> (i32, i32, i32) {
    %c0_i32 = arith.constant 0 : i32
    %c0_i32_0 = arith.constant 0 : i32
    return %arg0, %arg1, %c0_i32 : i32, i32, i32
  }
}

</mosaic_0001>

<llo_original>
// kernel: tpu_custom_call.1
$region0: #{tpu_custom_call.1}
  #allocation0 [shape = 'u32[]', space=smem, size = 0x4, offset = 0x4, fixed_abs, tag = 'smem constant byte address 0x4 - core index']
  #allocation1 [shape = 'u32[144,128]{1,0:T(1,128)}', space=vmem, size = 0x12000, scoped, tag = 'internal scratch']
  %s0 = inlined_call_operand.hbm [shape: f32[2,16,128], index: 0, kind: input, shape index: {}]
  %s1 = inlined_call_operand.hbm [shape: f32[2,128,128], index: 1, kind: input, shape index: {}]
  %s2 = inlined_call_operand.hbm [shape: f32[128,128], index: 2, kind: input, shape index: {}]
  %s3 = inlined_call_operand.hbm [shape: f32[128,128], index: 3, kind: input, shape index: {}]
  %s4 = inlined_call_operand.hbm [shape: f32[128,128], index: 4, kind: input, shape index: {}]
  %s5 = inlined_call_operand.vmem [shape: f32[1,128], index: 5, kind: input, shape index: {}]
  %s6 = inlined_call_operand.hbm [shape: f32[2,16,128], index: 6, kind: output, shape index: {0}]
  %s7 = inlined_call_operand.hbm [shape: f32[2,16,128], index: 7, kind: output, shape index: {1}]
  %8 = xla_tuple %s6, %s7
  %s9 = sld [smem:[#allocation0]]
  $region85: #{tpu_custom_call.1} parent=0
    _
  %s11 = ssub.s32 1, %s9
  %s12 = scalar_select 0, %s11, %s9
  $region1: #{tpu_custom_call.1} parent=0
    #allocation2 [shape = 'u8[16384]{0}', space=vmem, size = 0x4000, scoped, tag = 'input window, operand 0']
    #allocation3 [shape = 's32[2]{0}', space=sflag, size = 0x8, scoped, tag = 'scoped memory for tpu_custom_call.1']
    #allocation4 [shape = 's32[2]{0}', space=sflag, size = 0x8, scoped, tag = 'scoped memory for tpu_custom_call.1']
    #allocation5 [shape = 'u8[131072]{0}', space=vmem, size = 0x20000, scoped, tag = 'input window, operand 1']
    #allocation6 [shape = 's32[2]{0}', space=sflag, size = 0x8, scoped, tag = 'scoped memory for tpu_custom_call.1']
    #allocation7 [shape = 'u8[65536]{0}', space=vmem, size = 0x10000, scoped, tag = 'input window, operand 2, single buffered']
    #allocation8 [shape = 'u8[65536]{0}', space=vmem, size = 0x10000, scoped, tag = 'input window, operand 3, single buffered']
    #allocation9 [shape = 's32[1]{0}', space=sflag, size = 0x4, scoped, tag = 'scoped memory for tpu_custom_call.1']
    #allocation10 [shape = 'u8[65536]{0}', space=vmem, size = 0x10000, scoped, tag = 'input window, operand 4, single buffered']
    #allocation11 [shape = 'u8[16384]{0}', space=vmem, size = 0x4000, scoped, tag = 'output window, operand 0']
    #allocation12 [shape = 'u8[16384]{0}', space=vmem, size = 0x4000, scoped, tag = 'output window, operand 1']
    #allocation13 [shape = 's32[2]{0}', space=sflag, size = 0x8, scoped, tag = 'scoped memory for tpu_custom_call.1']
    %13 = vsyncpa [#allocation3], 0
    %s14 = scalar_lea.sflag [#allocation3], 1
    %15 = vsyncpa %s14, 0
    %16 = vsyncpa [#allocation6], 0
    %s17 = scalar_lea.sflag [#allocation6], 1
    %18 = vsyncpa %s17, 0
    %19 = vsyncpa [#allocation9], 0
    %20 = vsyncpa [#allocation4], 0
    %s21 = scalar_lea.sflag [#allocation4], 1
    %22 = vsyncpa %s21, 0
    %23 = vsyncpa [#allocation13], 0
    %s24 = scalar_lea.sflag [#allocation13], 1
    %25 = vsyncpa %s24, 0
    loop: start=0, step=1, limit=4
    $region2: #{tpu_custom_call.1} parent=1 // loop_pre_header
      _
    $region3: #{tpu_custom_call.1} parent=1 // loop_header
      %s27 = sphi 0, %s31
      %p28 = scmp.ge.s32.totalorder %s27, 4
      %s34 = sphi 0, %s46
      %s35 = sphi 0, %s42
      %s36 = sphi 0, %s34
      %s37 = sphi 0, %s35
      %s38 = sphi 0, %s36
      %s39 = sphi 0, %s37
      %s51 = sphi 0, %s53
      %s54 = sphi 0, %s51
      %s55 = sphi 0, %s54
      %s71 = sphi 0, %s55
      %s77 = sphi 0, %s79
      %s80 = sphi 0, %s77
      %s81 = sphi 0, %s80
      %s97 = sphi 0, %s81
      %s101 = sphi 0, %s101
      %s103 = sphi 0, %s101
      %s104 = sphi 0, %s103
      %s118 = sphi 0, %s104
      %s122 = sphi 0, %s122
      %s124 = sphi 0, %s122
      %s125 = sphi 0, %s124
      %s139 = sphi 0, %s125
      %s143 = sphi 0, %s143
      %s145 = sphi 0, %s143
      %s146 = sphi 0, %s145
      %s160 = sphi 0, %s146
      %s164 = sphi 0, %s164
      %s166 = sphi 0, %s164
      %s167 = sphi 0, %s166
      %s181 = sphi 0, %s167
      %s189 = sphi 0, %s191
      %s192 = sphi 0, %s189
      %s193 = sphi 0, %s192
      %s209 = sphi 0, %s193
      %s217 = sphi 0, %s219
      %s220 = sphi 0, %s217
      %s221 = sphi 0, %s220
      %s237 = sphi 0, %s221
    $region4: #{tpu_custom_call.1} parent=1 // loop_header_branch
      %30 = sbr.rel (%p28) target = $region8
    $region5: #{tpu_custom_call.1} parent=1 // loop_body
      %s32 = ssub.s32 %s27, 1
      %s33 = ssub.s32 %s27, 2
      %s40 = sadd.s32 1, %s35
      %p41 = scmp.ge.s32.totalorder %s40, 1
      %s42 = scalar_select %p41, 0, %s40
      %s43 = sadd.s32 1, %s34
      %s44 = scalar_select %p41, %s43, %s34
      %p45 = scmp.ge.s32.totalorder %s44, 2
      %s46 = scalar_select %p45, 0, %s44
      %s47 = ssub.s32 %s34, %s46
      %s48 = ssub.s32 %s35, %s42
      %s49 = sor.u32 %s47, %s48
      %p50 = scmp.eq.s32.totalorder %s49, 0
      %s52 = sadd.s32 %s51, 1
      %s53 = scalar_select %p50, %s51, %s52
      %p56 = pneg %p50
      %p57 = scmp.eq.s32.totalorder %s27, 1
      %p58 = por %p56, %p57
      %p59 = scmp.ne.s32.totalorder %s51, %s54
      %p60 = scmp.eq.s32.totalorder %s27, 0
      %p61 = por %p59, %p60
      %p62 = scmp.ne.s32.totalorder %s51, %s54
      %p63 = scmp.eq.s32.totalorder %s32, 1
      %p64 = por %p62, %p63
      %p65 = scmp.ne.s32.totalorder %s54, %s55
      %p66 = scmp.eq.s32.totalorder %s32, 0
      %p67 = por %p65, %p66
      %p68 = scmp.ne.s32.totalorder %s54, %s55
      %p69 = scmp.eq.s32.totalorder %s33, 1
      %p70 = por %p68, %p69
      %p72 = scmp.ne.s32.totalorder %s55, %s71
      %p73 = scmp.eq.s32.totalorder %s33, 0
      %p74 = por %p72, %p73
      %s75 = ssub.s32 %s34, %s46
      %p76 = scmp.eq.s32.totalorder %s75, 0
      %s78 = sadd.s32 %s77, 1
      %s79 = scalar_select %p76, %s77, %s78
      %p82 = pneg %p76
      %p83 = scmp.eq.s32.totalorder %s27, 1
      %p84 = por %p82, %p83
      %p85 = scmp.ne.s32.totalorder %s77, %s80
      %p86 = scmp.eq.s32.totalorder %s27, 0
      %p87 = por %p85, %p86
      %p88 = scmp.ne.s32.totalorder %s77, %s80
      %p89 = scmp.eq.s32.totalorder %s32, 1
      %p90 = por %p88, %p89
      %p91 = scmp.ne.s32.totalorder %s80, %s81
      %p92 = scmp.eq.s32.totalorder %s32, 0
      %p93 = por %p91, %p92
      %p94 = scmp.ne.s32.totalorder %s80, %s81
      %p95 = scmp.eq.s32.totalorder %s33, 1
      %p96 = por %p94, %p95
      %p98 = scmp.ne.s32.totalorder %s81, %s97
      %p99 = scmp.eq.s32.totalorder %s33, 0
      %p100 = por %p98, %p99
      %s102 = sadd.s32 %s101, 1
      %p105 = scmp.eq.s32.totalorder %s27, 1
      %p106 = scmp.ne.s32.totalorder %s101, %s103
      %p107 = scmp.eq.s32.totalorder %s27, 0
      %p108 = por %p106, %p107
      %p109 = scmp.ne.s32.totalorder %s101, %s103
      %p110 = scmp.eq.s32.totalorder %s32, 1
      %p111 = por %p109, %p110
      %p112 = scmp.ne.s32.totalorder %s103, %s104
      %p113 = scmp.eq.s32.totalorder %s32, 0
      %p114 = por %p112, %p113
      %p115 = scmp.ne.s32.totalorder %s103, %s104
      %p116 = scmp.eq.s32.totalorder %s33, 1
      %p117 = por %p115, %p116
      %p119 = scmp.ne.s32.totalorder %s104, %s118
      %p120 = scmp.eq.s32.totalorder %s33, 0
      %p121 = por %p119, %p120
      %s123 = sadd.s32 %s122, 1
      %p126 = scmp.eq.s32.totalorder %s27, 1
      %p127 = scmp.ne.s32.totalorder %s122, %s124
      %p128 = scmp.eq.s32.totalorder %s27, 0
      %p129 = por %p127, %p128
      %p130 = scmp.ne.s32.totalorder %s122, %s124
      %p131 = scmp.eq.s32.totalorder %s32, 1
      %p132 = por %p130, %p131
      %p133 = scmp.ne.s32.totalorder %s124, %s125
      %p134 = scmp.eq.s32.totalorder %s32, 0
      %p135 = por %p133, %p134
      %p136 = scmp.ne.s32.totalorder %s124, %s125
      %p137 = scmp.eq.s32.totalorder %s33, 1
      %p138 = por %p136, %p137
      %p140 = scmp.ne.s32.totalorder %s125, %s139
      %p141 = scmp.eq.s32.totalorder %s33, 0
      %p142 = por %p140, %p141
      %s144 = sadd.s32 %s143, 1
      %p147 = scmp.eq.s32.totalorder %s27, 1
      %p148 = scmp.ne.s32.totalorder %s143, %s145
      %p149 = scmp.eq.s32.totalorder %s27, 0
      %p150 = por %p148, %p149
      %p151 = scmp.ne.s32.totalorder %s143, %s145
      %p152 = scmp.eq.s32.totalorder %s32, 1
      %p153 = por %p151, %p152
      %p154 = scmp.ne.s32.totalorder %s145, %s146
      %p155 = scmp.eq.s32.totalorder %s32, 0
      %p156 = por %p154, %p155
      %p157 = scmp.ne.s32.totalorder %s145, %s146
      %p158 = scmp.eq.s32.totalorder %s33, 1
      %p159 = por %p157, %p158
      %p161 = scmp.ne.s32.totalorder %s146, %s160
      %p162 = scmp.eq.s32.totalorder %s33, 0
      %p163 = por %p161, %p162
      %s165 = sadd.s32 %s164, 1
      %p168 = scmp.eq.s32.totalorder %s27, 1
      %p169 = scmp.ne.s32.totalorder %s164, %s166
      %p170 = scmp.eq.s32.totalorder %s27, 0
      %p171 = por %p169, %p170
      %p172 = scmp.ne.s32.totalorder %s164, %s166
      %p173 = scmp.eq.s32.totalorder %s32, 1
      %p174 = por %p172, %p173
      %p175 = scmp.ne.s32.totalorder %s166, %s167
      %p176 = scmp.eq.s32.totalorder %s32, 0
      %p177 = por %p175, %p176
      %p178 = scmp.ne.s32.totalorder %s166, %s167
      %p179 = scmp.eq.s32.totalorder %s33, 1
      %p180 = por %p178, %p179
      %p182 = scmp.ne.s32.totalorder %s167, %s181
      %p183 = scmp.eq.s32.totalorder %s33, 0
      %p184 = por %p182, %p183
      %s185 = ssub.s32 %s34, %s46
      %s186 = ssub.s32 %s35, %s42
      %s187 = sor.u32 %s185, %s186
      %p188 = scmp.eq.s32.totalorder %s187, 0
      %s190 = sadd.s32 %s189, 1
      %s191 = scalar_select %p188, %s189, %s190
      %p194 = pneg %p188
      %p195 = scmp.eq.s32.totalorder %s27, 1
      %p196 = por %p194, %p195
      %p197 = scmp.ne.s32.totalorder %s189, %s192
      %p198 = scmp.eq.s32.totalorder %s27, 0
      %p199 = por %p197, %p198
      %p200 = scmp.ne.s32.totalorder %s189, %s192
      %p201 = scmp.eq.s32.totalorder %s32, 1
      %p202 = por %p200, %p201
      %p203 = scmp.ne.s32.totalorder %s192, %s193
      %p204 = scmp.eq.s32.totalorder %s32, 0
      %p205 = por %p203, %p204
      %p206 = scmp.ne.s32.totalorder %s192, %s193
      %p207 = scmp.eq.s32.totalorder %s33, 1
      %p208 = por %p206, %p207
      %p210 = scmp.ne.s32.totalorder %s193, %s209
      %p211 = scmp.eq.s32.totalorder %s33, 0
      %p212 = por %p210, %p211
      %s213 = ssub.s32 %s34, %s46
      %s214 = ssub.s32 %s35, %s42
      %s215 = sor.u32 %s213, %s214
      %p216 = scmp.eq.s32.totalorder %s215, 0
      %s218 = sadd.s32 %s217, 1
      %s219 = scalar_select %p216, %s217, %s218
      %p222 = pneg %p216
      %p223 = scmp.eq.s32.totalorder %s27, 1
      %p224 = por %p222, %p223
      %p225 = scmp.ne.s32.totalorder %s217, %s220
      %p226 = scmp.eq.s32.totalorder %s27, 0
      %p227 = por %p225, %p226
      %p228 = scmp.ne.s32.totalorder %s217, %s220
      %p229 = scmp.eq.s32.totalorder %s32, 1
      %p230 = por %p228, %p229
      %p231 = scmp.ne.s32.totalorder %s220, %s221
      %p232 = scmp.eq.s32.totalorder %s32, 0
      %p233 = por %p231, %p232
      %p234 = scmp.ne.s32.totalorder %s220, %s221
      %p235 = scmp.eq.s32.totalorder %s33, 1
      %p236 = por %p234, %p235
      %p238 = scmp.ne.s32.totalorder %s221, %s237
      %p239 = scmp.eq.s32.totalorder %s33, 0
      %p240 = por %p238, %p239
      %p241 = scmp.le.s32.totalorder 1, %s27
      %p242 = scmp.lt.s32.totalorder %s27, 3
      %p243 = pnand %p241, %p242
      %p244 = pneg %p243
      // Predicated region
      $region9: #{tpu_custom_call.1} parent=5 // pred_check
        _
      $region10: #{tpu_custom_call.1} parent=5 // pred_check_branch
        %246 = sbr.rel (%p243) target = $region12
      $region11: #{tpu_custom_call.1} parent=5 // pred_region
        %s247 = ssub.s32 %s27, 1
        // Predicated region
        $region13: #{tpu_custom_call.1} parent=11 // pred_check
          %p248 = pneg %p114
        $region14: #{tpu_custom_call.1} parent=11 // pred_check_branch
          %250 = sbr.rel (%p248) target = $region16
        $region15: #{tpu_custom_call.1} parent=11 // pred_region
          %s252 = ssub.s32 2048, 2048
          %253 = vsyncadd [#allocation6], %s252
          %s254 = sshll.u32 [#allocation7], 4
          %s255 = int_to_ptr.vmem [resolvable:$true] %s254
          %260 = dma.hbm_to_vmem [thread:$0]  %s2, 2048, %s255, [#allocation6], 128, 128, 8
        $region16: #{tpu_custom_call.1} parent=11 // pred_fallthru
          _
        // Predicated region
        $region17: #{tpu_custom_call.1} parent=11 // pred_check
          %p261 = pneg %p135
        $region18: #{tpu_custom_call.1} parent=11 // pred_check_branch
          %263 = sbr.rel (%p261) target = $region20
        $region19: #{tpu_custom_call.1} parent=11 // pred_region
          %s265 = ssub.s32 2048, 2048
          %266 = vsyncadd [#allocation9], %s265
          %s267 = sshll.u32 [#allocation8], 4
          %s268 = int_to_ptr.vmem [resolvable:$true] %s267
          %273 = dma.hbm_to_vmem [thread:$0]  %s3, 2048, %s268, [#allocation9], 128, 128, 8
        $region20: #{tpu_custom_call.1} parent=11 // pred_fallthru
          _
        // Predicated region
        $region21: #{tpu_custom_call.1} parent=11 // pred_check
          %p274 = pneg %p156
        $region22: #{tpu_custom_call.1} parent=11 // pred_check_branch
          %276 = sbr.rel (%p274) target = $region24
        $region23: #{tpu_custom_call.1} parent=11 // pred_region
          %s278 = ssub.s32 2048, 2048
          %279 = vsyncadd [#allocation9], %s278
          %s280 = sshll.u32 [#allocation10], 4
          %s281 = int_to_ptr.vmem [resolvable:$true] %s280
          %286 = dma.hbm_to_vmem [thread:$0]  %s4, 2048, %s281, [#allocation9], 128, 128, 8
        $region24: #{tpu_custom_call.1} parent=11 // pred_fallthru
          _
        // Predicated region
        $region25: #{tpu_custom_call.1} parent=11 // pred_check
          %p287 = pneg %p177
        $region26: #{tpu_custom_call.1} parent=11 // pred_check_branch
          %289 = sbr.rel (%p287) target = $region28
        $region27: #{tpu_custom_call.1} parent=11 // pred_region
          _
        $region28: #{tpu_custom_call.1} parent=11 // pred_fallthru
          _
      $region12: #{tpu_custom_call.1} parent=5 // pred_fallthru
        _
      %p290 = scmp.lt.s32.totalorder %s27, 2
      // Predicated region
      $region29: #{tpu_custom_call.1} parent=5 // pred_check
        %p291 = pneg %p290
      $region30: #{tpu_custom_call.1} parent=5 // pred_check_branch
        %293 = sbr.rel (%p291) target = $region32
      $region31: #{tpu_custom_call.1} parent=5 // pred_region
        // Predicated region
        $region33: #{tpu_custom_call.1} parent=31 // pred_check
          %p294 = pneg %p61
        $region34: #{tpu_custom_call.1} parent=31 // pred_check_branch
          %296 = sbr.rel (%p294) target = $region36
        $region35: #{tpu_custom_call.1} parent=31 // pred_region
          %s297 = sand.u32 %s51, 1
          %s298 = scalar_lea.sflag [#allocation3], %s297
          %s299 = sand.u32 %s51, 1
          %s300 = smul.addr %s299, 16
          %s301 = scalar_lea.vmem [#allocation2], %s300
          %s302 = smul.u32 2, %s35
          %s304 = ssub.s32 256, 256
          %305 = vsyncadd %s298, %s304
          %s306 = smul.addr %s34, 2
          %s307 = sadd.s32 %s302, %s306
          %s308 = smul.addr %s307, 128
          %s309 = scalar_lea.hbm %s0, %s308
          %s310 = sshll.u32 %s301, 4
          %s311 = int_to_ptr.vmem [resolvable:$true] %s310
          %316 = dma.hbm_to_vmem [thread:$0]  %s309, 256, %s311, %s298, 128, 128, 8
        $region36: #{tpu_custom_call.1} parent=31 // pred_fallthru
          _
        // Predicated region
        $region37: #{tpu_custom_call.1} parent=31 // pred_check
          %p317 = pneg %p87
        $region38: #{tpu_custom_call.1} parent=31 // pred_check_branch
          %319 = sbr.rel (%p317) target = $region40
        $region39: #{tpu_custom_call.1} parent=31 // pred_region
          %s320 = sand.u32 %s27, 1
          %s321 = scalar_lea.sflag [#allocation6], %s320
          %s322 = sand.u32 %s77, 1
          %s323 = smul.addr %s322, 128
          %s324 = scalar_lea.vmem [#allocation5], %s323
          %s326 = ssub.s32 2048, 2048
          %327 = vsyncadd %s321, %s326
          %s328 = smul.addr %s34, 16
          %s329 = smul.addr %s328, 128
          %s330 = scalar_lea.hbm %s1, %s329
          %s331 = sshll.u32 %s324, 4
          %s332 = int_to_ptr.vmem [resolvable:$true] %s331
          %337 = dma.hbm_to_vmem [thread:$0]  %s330, 2048, %s332, %s321, 128, 128, 8
        $region40: #{tpu_custom_call.1} parent=31 // pred_fallthru
          _
      $region32: #{tpu_custom_call.1} parent=5 // pred_fallthru
        _
      %p338 = scmp.le.s32.totalorder 1, %s27
      %p339 = scmp.lt.s32.totalorder %s27, 3
      %p340 = pnand %p338, %p339
      %p341 = pneg %p340
      // Predicated region
      $region41: #{tpu_custom_call.1} parent=5 // pred_check
        _
      $region42: #{tpu_custom_call.1} parent=5 // pred_check_branch
        %343 = sbr.rel (%p340) target = $region44
      $region43: #{tpu_custom_call.1} parent=5 // pred_region
        %s344 = ssub.s32 %s27, 1
        %s345 = sand.u32 %s54, 1
        %s346 = scalar_lea.sflag [#allocation3], %s345
        %s347 = sand.u32 %s54, 1
        %s348 = smul.addr %s347, 16
        %s349 = scalar_lea.vmem [#allocation2], %s348
        // Predicated region
        $region45: #{tpu_custom_call.1} parent=43 // pred_check
          %p350 = pneg %p67
        $region46: #{tpu_custom_call.1} parent=43 // pred_check_branch
          %352 = sbr.rel (%p350) target = $region48
        $region47: #{tpu_custom_call.1} parent=43 // pred_region
          %353 = dma.done %s346, 256
        $region48: #{tpu_custom_call.1} parent=43 // pred_fallthru
          _
        %s354 = sand.u32 %s32, 1
        %s355 = scalar_lea.sflag [#allocation6], %s354
        %s356 = sand.u32 %s80, 1
        %s357 = smul.addr %s356, 128
        %s358 = scalar_lea.vmem [#allocation5], %s357
        // Predicated region
        $region49: #{tpu_custom_call.1} parent=43 // pred_check
          %p359 = pneg %p93
        $region50: #{tpu_custom_call.1} parent=43 // pred_check_branch
          %361 = sbr.rel (%p359) target = $region52
        $region51: #{tpu_custom_call.1} parent=43 // pred_region
          %362 = dma.done %s355, 2048
        $region52: #{tpu_custom_call.1} parent=43 // pred_fallthru
          _
        // Predicated region
        $region53: #{tpu_custom_call.1} parent=43 // pred_check
          %p363 = pneg %p114
        $region54: #{tpu_custom_call.1} parent=43 // pred_check_branch
          %365 = sbr.rel (%p363) target = $region56
        $region55: #{tpu_custom_call.1} parent=43 // pred_region
          %366 = dma.done [#allocation6], 2048
        $region56: #{tpu_custom_call.1} parent=43 // pred_fallthru
          _
        // Predicated region
        $region57: #{tpu_custom_call.1} parent=43 // pred_check
          %p367 = pneg %p135
        $region58: #{tpu_custom_call.1} parent=43 // pred_check_branch
          %369 = sbr.rel (%p367) target = $region60
        $region59: #{tpu_custom_call.1} parent=43 // pred_region
          %370 = dma.done [#allocation9], 2048
        $region60: #{tpu_custom_call.1} parent=43 // pred_fallthru
          _
        // Predicated region
        $region61: #{tpu_custom_call.1} parent=43 // pred_check
          %p371 = pneg %p156
        $region62: #{tpu_custom_call.1} parent=43 // pred_check_branch
          %373 = sbr.rel (%p371) target = $region64
        $region63: #{tpu_custom_call.1} parent=43 // pred_region
          %374 = dma.done [#allocation9], 2048
        $region64: #{tpu_custom_call.1} parent=43 // pred_fallthru
          _
        %s375 = sand.u32 %s54, 1
        %s376 = scalar_lea.sflag [#allocation3], %s375
        %s377 = sand.u32 %s54, 1
        %s378 = smul.addr %s377, 16
        %s379 = scalar_lea.vmem [#allocation2], %s378
        %p380 = pneg %p67
        %p381 = pneg %p64
        %s382 = sand.u32 %s32, 1
        %s383 = scalar_lea.sflag [#allocation6], %s382
        %s384 = sand.u32 %s80, 1
        %s385 = smul.addr %s384, 128
        %s386 = scalar_lea.vmem [#allocation5], %s385
        %p387 = pneg %p93
        %p388 = pneg %p90
        %p389 = pneg %p114
        %p390 = pneg %p111
        %p391 = pneg %p135
        %p392 = pneg %p132
        %p393 = pneg %p156
        %p394 = pneg %p153
        %p395 = pneg %p177
        %p396 = pneg %p174
        %p397 = pneg %p205
        %p398 = pneg %p202
        %s399 = sand.u32 %s192, 1
        %s400 = scalar_lea.sflag [#allocation4], %s399
        %s401 = sand.u32 %s192, 1
        %s402 = smul.addr %s401, 16
        %s403 = scalar_lea.vmem [#allocation11], %s402
        %p404 = pneg %p233
        %p405 = pneg %p230
        %s406 = sand.u32 %s220, 1
        %s407 = scalar_lea.sflag [#allocation13], %s406
        %s408 = sand.u32 %s220, 1
        %s409 = smul.addr %s408, 16
        %s410 = scalar_lea.vmem [#allocation12], %s409
        %s411 = smul.u32 2, %s37
        %s412 = smul.u32 2, %s37
        %s413 = smul.u32 2, %s37
        %v414 = vld [vmem:[%s349] sm:$0xff]
        %v415 = vld [vmem:[%s349 + $0x8] sm:$0xff]
        %v416 = vld [vmem:[%s358] sm:$0xff]
        %v417 = vld [vmem:[%s358 + $0x8] sm:$0xff]
        %v418 = vld [vmem:[%s358 + $0x10] sm:$0xff]
        %v419 = vld [vmem:[%s358 + $0x18] sm:$0xff]
        %v420 = vld [vmem:[%s358 + $0x20] sm:$0xff]
        %v421 = vld [vmem:[%s358 + $0x28] sm:$0xff]
        %v422 = vld [vmem:[%s358 + $0x30] sm:$0xff]
        %v423 = vld [vmem:[%s358 + $0x38] sm:$0xff]
        %v424 = vld [vmem:[%s358 + $0x40] sm:$0xff]
        %v425 = vld [vmem:[%s358 + $0x48] sm:$0xff]
        %v426 = vld [vmem:[%s358 + $0x50] sm:$0xff]
        %v427 = vld [vmem:[%s358 + $0x58] sm:$0xff]
        %v428 = vld [vmem:[%s358 + $0x60] sm:$0xff]
        %v429 = vld [vmem:[%s358 + $0x68] sm:$0xff]
        %v430 = vld [vmem:[%s358 + $0x70] sm:$0xff]
        %v431 = vld [vmem:[%s358 + $0x78] sm:$0xff]
        %v432 = vld [vmem:[#allocation7] sm:$0xff]
        %v433 = vld [vmem:[#allocation7 + $0x8] sm:$0xff]
        %v434 = vld [vmem:[#allocation7 + $0x10] sm:$0xff]
        %v435 = vld [vmem:[#allocation7 + $0x18] sm:$0xff]
        %v436 = vld [vmem:[#allocation7 + $0x20] sm:$0xff]
        %v437 = vld [vmem:[#allocation7 + $0x28] sm:$0xff]
        %v438 = vld [vmem:[#allocation7 + $0x30] sm:$0xff]
        %v439 = vld [vmem:[#allocation7 + $0x38] sm:$0xff]
        %v440 = vld [vmem:[#allocation7 + $0x40] sm:$0xff]
        %v441 = vld [vmem:[#allocation7 + $0x48] sm:$0xff]
        %v442 = vld [vmem:[#allocation7 + $0x50] sm:$0xff]
        %v443 = vld [vmem:[#allocation7 + $0x58] sm:$0xff]
        %v444 = vld [vmem:[#allocation7 + $0x60] sm:$0xff]
        %v445 = vld [vmem:[#allocation7 + $0x68] sm:$0xff]
        %v446 = vld [vmem:[#allocation7 + $0x70] sm:$0xff]
        %v447 = vld [vmem:[#allocation7 + $0x78] sm:$0xff]
        %448 = vmatprep.subr.mxu0 0.0
        %449 = vmatpush1.msra.mxu0 %v432
        %450 = vmatprep.subr.mxu0 0.0
        %451 = vmatpush1.msra.mxu0 %v433
        %452 = vmatprep.subr.mxu0 0.0
        %453 = vmatpush1.msra.mxu0 %v434
        %454 = vmatprep.subr.mxu0 0.0
        %455 = vmatpush1.msra.mxu0 %v435
        %456 = vmatprep.subr.mxu0 0.0
        %457 = vmatpush1.msra.mxu0 %v436
        %458 = vmatprep.subr.mxu0 0.0
        %459 = vmatpush1.msra.mxu0 %v437
        %460 = vmatprep.subr.mxu0 0.0
        %461 = vmatpush1.msra.mxu0 %v438
        %462 = vmatprep.subr.mxu0 0.0
        %463 = vmatpush1.msra.mxu0 %v439
        %464 = vmatprep.subr.mxu0 0.0
        %465 = vmatpush1.msra.mxu0 %v440
        %466 = vmatprep.subr.mxu0 0.0
        %467 = vmatpush1.msra.mxu0 %v441
        %468 = vmatprep.subr.mxu0 0.0
        %469 = vmatpush1.msra.mxu0 %v442
        %470 = vmatprep.subr.mxu0 0.0
        %471 = vmatpush1.msra.mxu0 %v443
        %472 = vmatprep.subr.mxu0 0.0
        %473 = vmatpush1.msra.mxu0 %v444
        %474 = vmatprep.subr.mxu0 0.0
        %475 = vmatpush1.msra.mxu0 %v445
        %476 = vmatprep.subr.mxu0 0.0
        %477 = vmatpush1.msra.mxu0 %v446
        %478 = vmatprep.subr.mxu0 0.0
        %479 = vmatpush1.msra.mxu0 %v447
        %480 = vmatprep.subr.mxu0 0.0
        %481 = vmatpush1.msra.mxu0 0.0
        %482 = vmatprep.subr.mxu0 0.0
        %483 = vmatpush1.msra.mxu0 0.0
        %484 = vmatprep.subr.mxu0 0.0
        %485 = vmatpush1.msra.mxu0 0.0
        %486 = vmatprep.subr.mxu0 0.0
        %487 = vmatpush1.msra.mxu0 0.0
        %488 = vmatprep.subr.mxu0 0.0
        %489 = vmatpush1.msra.mxu0 0.0
        %490 = vmatprep.subr.mxu0 0.0
        %491 = vmatpush1.msra.mxu0 0.0
        %492 = vmatprep.subr.mxu0 0.0
        %493 = vmatpush1.msra.mxu0 0.0
        %494 = vmatprep.subr.mxu0 0.0
        %495 = vmatpush1.msra.mxu0 0.0
        %496 = vmatprep.subr.mxu0 0.0
        %497 = vmatpush1.msra.mxu0 0.0
        %498 = vmatprep.subr.mxu0 0.0
        %499 = vmatpush1.msra.mxu0 0.0
        %500 = vmatprep.subr.mxu0 0.0
        %501 = vmatpush1.msra.mxu0 0.0
        %502 = vmatprep.subr.mxu0 0.0
        %503 = vmatpush1.msra.mxu0 0.0
        %504 = vmatprep.subr.mxu0 0.0
        %505 = vmatpush1.msra.mxu0 0.0
        %506 = vmatprep.subr.mxu0 0.0
        %507 = vmatpush1.msra.mxu0 0.0
        %508 = vmatprep.subr.mxu0 0.0
        %509 = vmatpush1.msra.mxu0 0.0
        %510 = vmatprep.subr.mxu0 0.0
        %511 = vmatpush1.msra.mxu0 0.0
        %512 = vmatprep.mubr.f32.mxu0 0.0
        %513 = vmatmul.mubr.f32.gmra.mrb[0].mxu0 %v414
        %v514 = vpop.f32.mrb[0].mxu0
        %v515 = vadd.f32 0.0, %v514
        %v516 = vpop.f32.mrb[0].mxu0
        %517 = vmatprep.mubr.f32.mxu0 0.0
        %518 = vmatmul.mubr.f32.gmra.mrb[0].mxu0 %v415
        %v519 = vpop.f32.mrb[0].mxu0
        %v520 = vadd.f32 0.0, %v519
        %v521 = vpop.f32.mrb[0].mxu0
        %522 = vdwg.mxu0
        %523 = vmatprep.subr.mxu0 0.0
        %524 = vmatpush1.xpose.msra.mxu0 %v416
        %525 = vmatprep.subr.mxu0 0.0
        %526 = vmatpush1.xpose.msra.mxu0 %v417
        %527 = vmatprep.subr.mxu0 0.0
        %528 = vmatpush1.xpose.msra.mxu0 %v418
        %529 = vmatprep.subr.mxu0 0.0
        %530 = vmatpush1.xpose.msra.mxu0 %v419
        %531 = vmatprep.subr.mxu0 0.0
        %532 = vmatpush1.xpose.msra.mxu0 %v420
        %533 = vmatprep.subr.mxu0 0.0
        %534 = vmatpush1.xpose.msra.mxu0 %v421
        %535 = vmatprep.subr.mxu0 0.0
        %536 = vmatpush1.xpose.msra.mxu0 %v422
        %537 = vmatprep.subr.mxu0 0.0
        %538 = vmatpush1.xpose.msra.mxu0 %v423
        %539 = vmatprep.subr.mxu0 0.0
        %540 = vmatpush1.xpose.msra.mxu0 %v424
        %541 = vmatprep.subr.mxu0 0.0
        %542 = vmatpush1.xpose.msra.mxu0 %v425
        %543 = vmatprep.subr.mxu0 0.0
        %544 = vmatpush1.xpose.msra.mxu0 %v426
        %545 = vmatprep.subr.mxu0 0.0
        %546 = vmatpush1.xpose.msra.mxu0 %v427
        %547 = vmatprep.subr.mxu0 0.0
        %548 = vmatpush1.xpose.msra.mxu0 %v428
        %549 = vmatprep.subr.mxu0 0.0
        %550 = vmatpush1.xpose.msra.mxu0 %v429
        %551 = vmatprep.subr.mxu0 0.0
        %552 = vmatpush1.xpose.msra.mxu0 %v430
        %553 = vmatprep.subr.mxu0 0.0
        %554 = vmatpush1.xpose.msra.mxu0 %v431
        %555 = vmatprep.subr.mxu0 0.0
        %556 = vmatpush1.xpose.msra.mxu0 0.0
        %557 = vmatprep.subr.mxu0 0.0
        %558 = vmatpush1.xpose.msra.mxu0 0.0
        %559 = vmatprep.subr.mxu0 0.0
        %560 = vmatpush1.xpose.msra.mxu0 0.0
        %561 = vmatprep.subr.mxu0 0.0
        %562 = vmatpush1.xpose.msra.mxu0 0.0
        %563 = vmatprep.subr.mxu0 0.0
        %564 = vmatpush1.xpose.msra.mxu0 0.0
        %565 = vmatprep.subr.mxu0 0.0
        %566 = vmatpush1.xpose.msra.mxu0 0.0
        %567 = vmatprep.subr.mxu0 0.0
        %568 = vmatpush1.xpose.msra.mxu0 0.0
        %569 = vmatprep.subr.mxu0 0.0
        %570 = vmatpush1.xpose.msra.mxu0 0.0
        %571 = vmatprep.subr.mxu0 0.0
        %572 = vmatpush1.xpose.msra.mxu0 0.0
        %573 = vmatprep.subr.mxu0 0.0
        %574 = vmatpush1.xpose.msra.mxu0 0.0
        %575 = vmatprep.subr.mxu0 0.0
        %576 = vmatpush1.xpose.msra.mxu0 0.0
        %577 = vmatprep.subr.mxu0 0.0
        %578 = vmatpush1.xpose.msra.mxu0 0.0
        %579 = vmatprep.subr.mxu0 0.0
        %580 = vmatpush1.xpose.msra.mxu0 0.0
        %581 = vmatprep.subr.mxu0 0.0
        %582 = vmatpush1.xpose.msra.mxu0 0.0
        %583 = vmatprep.subr.mxu0 0.0
        %584 = vmatpush1.xpose.msra.mxu0 0.0
        %585 = vmatprep.subr.mxu0 0.0
        %586 = vmatpush1.xpose.msra.mxu0 0.0
        %587 = vmatprep.mubr.f32.mxu0 0.0
        %588 = vmatmul.mubr.f32.gmra.mrb[0].mxu0 %v515
        %v589 = vpop.f32.mrb[0].mxu0
        %v590 = vadd.f32 0.0, %v589
        %v591 = vpop.f32.mrb[0].mxu0
        %592 = vmatprep.mubr.f32.mxu0 0.0
        %593 = vmatmul.mubr.f32.gmra.mrb[0].mxu0 %v520
        %v594 = vpop.f32.mrb[0].mxu0
        %v595 = vadd.f32 0.0, %v594
        %v596 = vpop.f32.mrb[0].mxu0
        %597 = vdwg.mxu0
        %598 = vmax.xlane.f32.xlu0 %v590
        %v599 = vpop.xlane.xlu0 %598
        %600 = vmax.xlane.f32.xlu0 %v595
        %v601 = vpop.xlane.xlu0 %600
        %v602 = vsub.f32 %v590, %v599
        %v603 = vsub.f32 %v595, %v601
        %v604 = vmul.f32 %v602, 1.442695
        %v605 = vpow.pop %v604
        %v606 = vmul.f32 %v603, 1.442695
        %v607 = vpow.pop %v606
        %608 = vadd.xlane.f32.xlu0 %v605
        %v609 = vpop.xlane.xlu0 %608
        %610 = vadd.xlane.f32.xlu0 %v607
        %v611 = vpop.xlane.xlu0 %610
        %v612 = vrcp.pop %v609
        %v613 = vmul.f32 %v605, %v612
        %v614 = vrcp.pop %v611
        %v615 = vmul.f32 %v607, %v614
        %616 = vmatprep.subr.mxu0 0.0
        %617 = vmatpush1.msra.mxu0 %v416
        %618 = vmatprep.subr.mxu0 0.0
        %619 = vmatpush1.msra.mxu0 %v417
        %620 = vmatprep.subr.mxu0 0.0
        %621 = vmatpush1.msra.mxu0 %v418
        %622 = vmatprep.subr.mxu0 0.0
        %623 = vmatpush1.msra.mxu0 %v419
        %624 = vmatprep.subr.mxu0 0.0
        %625 = vmatpush1.msra.mxu0 %v420
        %626 = vmatprep.subr.mxu0 0.0
        %627 = vmatpush1.msra.mxu0 %v421
        %628 = vmatprep.subr.mxu0 0.0
        %629 = vmatpush1.msra.mxu0 %v422
        %630 = vmatprep.subr.mxu0 0.0
        %631 = vmatpush1.msra.mxu0 %v423
        %632 = vmatprep.subr.mxu0 0.0
        %633 = vmatpush1.msra.mxu0 %v424
        %634 = vmatprep.subr.mxu0 0.0
        %635 = vmatpush1.msra.mxu0 %v425
        %636 = vmatprep.subr.mxu0 0.0
        %637 = vmatpush1.msra.mxu0 %v426
        %638 = vmatprep.subr.mxu0 0.0
        %639 = vmatpush1.msra.mxu0 %v427
        %640 = vmatprep.subr.mxu0 0.0
        %641 = vmatpush1.msra.mxu0 %v428
        %642 = vmatprep.subr.mxu0 0.0
        %643 = vmatpush1.msra.mxu0 %v429
        %644 = vmatprep.subr.mxu0 0.0
        %645 = vmatpush1.msra.mxu0 %v430
        %646 = vmatprep.subr.mxu0 0.0
        %647 = vmatpush1.msra.mxu0 %v431
        %648 = vmatprep.subr.mxu0 0.0
        %649 = vmatpush1.msra.mxu0 0.0
        %650 = vmatprep.subr.mxu0 0.0
        %651 = vmatpush1.msra.mxu0 0.0
        %652 = vmatprep.subr.mxu0 0.0
        %653 = vmatpush1.msra.mxu0 0.0
        %654 = vmatprep.subr.mxu0 0.0
        %655 = vmatpush1.msra.mxu0 0.0
        %656 = vmatprep.subr.mxu0 0.0
        %657 = vmatpush1.msra.mxu0 0.0
        %658 = vmatprep.subr.mxu0 0.0
        %659 = vmatpush1.msra.mxu0 0.0
        %660 = vmatprep.subr.mxu0 0.0
        %661 = vmatpush1.msra.mxu0 0.0
        %662 = vmatprep.subr.mxu0 0.0
        %663 = vmatpush1.msra.mxu0 0.0
        %664 = vmatprep.subr.mxu0 0.0
        %665 = vmatpush1.msra.mxu0 0.0
        %666 = vmatprep.subr.mxu0 0.0
        %667 = vmatpush1.msra.mxu0 0.0
        %668 = vmatprep.subr.mxu0 0.0
        %669 = vmatpush1.msra.mxu0 0.0
        %670 = vmatprep.subr.mxu0 0.0
        %671 = vmatpush1.msra.mxu0 0.0
        %672 = vmatprep.subr.mxu0 0.0
        %673 = vmatpush1.msra.mxu0 0.0
        %674 = vmatprep.subr.mxu0 0.0
        %675 = vmatpush1.msra.mxu0 0.0
        %676 = vmatprep.subr.mxu0 0.0
        %677 = vmatpush1.msra.mxu0 0.0
        %678 = vmatprep.subr.mxu0 0.0
        %679 = vmatpush1.msra.mxu0 0.0
        %680 = vmatprep.mubr.f32.mxu0 0.0
        %681 = vmatmul.mubr.f32.gmra.mrb[0].mxu0 %v613
        %v682 = vpop.f32.mrb[0].mxu0
        %v683 = vadd.f32 0.0, %v682
        %v684 = vpop.f32.mrb[0].mxu0
        %685 = vmatprep.mubr.f32.mxu0 0.0
        %686 = vmatmul.mubr.f32.gmra.mrb[0].mxu0 %v615
        %v687 = vpop.f32.mrb[0].mxu0
        %v688 = vadd.f32 0.0, %v687
        %v689 = vpop.f32.mrb[0].mxu0
        %690 = vdwg.mxu0
        %v691 = vld [vmem:[#allocation8] sm:$0xff]
        %v692 = vld [vmem:[#allocation8 + $0x8] sm:$0xff]
        %v693 = vld [vmem:[#allocation8 + $0x10] sm:$0xff]
        %v694 = vld [vmem:[#allocation8 + $0x18] sm:$0xff]
        %v695 = vld [vmem:[#allocation8 + $0x20] sm:$0xff]
        %v696 = vld [vmem:[#allocation8 + $0x28] sm:$0xff]
        %v697 = vld [vmem:[#allocation8 + $0x30] sm:$0xff]
        %v698 = vld [vmem:[#allocation8 + $0x38] sm:$0xff]
        %v699 = vld [vmem:[#allocation8 + $0x40] sm:$0xff]
        %v700 = vld [vmem:[#allocation8 + $0x48] sm:$0xff]
        %v701 = vld [vmem:[#allocation8 + $0x50] sm:$0xff]
        %v702 = vld [vmem:[#allocation8 + $0x58] sm:$0xff]
        %v703 = vld [vmem:[#allocation8 + $0x60] sm:$0xff]
        %v704 = vld [vmem:[#allocation8 + $0x68] sm:$0xff]
        %v705 = vld [vmem:[#allocation8 + $0x70] sm:$0xff]
        %v706 = vld [vmem:[#allocation8 + $0x78] sm:$0xff]
        %v707 = vld [vmem:[#allocation10] sm:$0xff]
        %v708 = vld [vmem:[#allocation10 + $0x8] sm:$0xff]
        %v709 = vld [vmem:[#allocation10 + $0x10] sm:$0xff]
        %v710 = vld [vmem:[#allocation10 + $0x18] sm:$0xff]
        %v711 = vld [vmem:[#allocation10 + $0x20] sm:$0xff]
        %v712 = vld [vmem:[#allocation10 + $0x28] sm:$0xff]
        %v713 = vld [vmem:[#allocation10 + $0x30] sm:$0xff]
        %v714 = vld [vmem:[#allocation10 + $0x38] sm:$0xff]
        %v715 = vld [vmem:[#allocation10 + $0x40] sm:$0xff]
        %v716 = vld [vmem:[#allocation10 + $0x48] sm:$0xff]
        %v717 = vld [vmem:[#allocation10 + $0x50] sm:$0xff]
        %v718 = vld [vmem:[#allocation10 + $0x58] sm:$0xff]
        %v719 = vld [vmem:[#allocation10 + $0x60] sm:$0xff]
        %v720 = vld [vmem:[#allocation10 + $0x68] sm:$0xff]
        %v721 = vld [vmem:[#allocation10 + $0x70] sm:$0xff]
        %v722 = vld [vmem:[#allocation10 + $0x78] sm:$0xff]
        %723 = vmatprep.subr.mxu0 0.0
        %724 = vmatpush1.msra.mxu0 %v707
        %725 = vmatprep.subr.mxu0 0.0
        %726 = vmatpush1.msra.mxu0 %v708
        %727 = vmatprep.subr.mxu0 0.0
        %728 = vmatpush1.msra.mxu0 %v709
        %729 = vmatprep.subr.mxu0 0.0
        %730 = vmatpush1.msra.mxu0 %v710
        %731 = vmatprep.subr.mxu0 0.0
        %732 = vmatpush1.msra.mxu0 %v711
        %733 = vmatprep.subr.mxu0 0.0
        %734 = vmatpush1.msra.mxu0 %v712
        %735 = vmatprep.subr.mxu0 0.0
        %736 = vmatpush1.msra.mxu0 %v713
        %737 = vmatprep.subr.mxu0 0.0
        %738 = vmatpush1.msra.mxu0 %v714
        %739 = vmatprep.subr.mxu0 0.0
        %740 = vmatpush1.msra.mxu0 %v715
        %741 = vmatprep.subr.mxu0 0.0
        %742 = vmatpush1.msra.mxu0 %v716
        %743 = vmatprep.subr.mxu0 0.0
        %744 = vmatpush1.msra.mxu0 %v717
        %745 = vmatprep.subr.mxu0 0.0
        %746 = vmatpush1.msra.mxu0 %v718
        %747 = vmatprep.subr.mxu0 0.0
        %748 = vmatpush1.msra.mxu0 %v719
        %749 = vmatprep.subr.mxu0 0.0
        %750 = vmatpush1.msra.mxu0 %v720
        %751 = vmatprep.subr.mxu0 0.0
        %752 = vmatpush1.msra.mxu0 %v721
        %753 = vmatprep.subr.mxu0 0.0
        %754 = vmatpush1.msra.mxu0 %v722
        %755 = vmatprep.subr.mxu0 0.0
        %756 = vmatpush1.msra.mxu0 0.0
        %757 = vmatprep.subr.mxu0 0.0
        %758 = vmatpush1.msra.mxu0 0.0
        %759 = vmatprep.subr.mxu0 0.0
        %760 = vmatpush1.msra.mxu0 0.0
        %761 = vmatprep.subr.mxu0 0.0
        %762 = vmatpush1.msra.mxu0 0.0
        %763 = vmatprep.subr.mxu0 0.0
        %764 = vmatpush1.msra.mxu0 0.0
        %765 = vmatprep.subr.mxu0 0.0
        %766 = vmatpush1.msra.mxu0 0.0
        %767 = vmatprep.subr.mxu0 0.0
        %768 = vmatpush1.msra.mxu0 0.0
        %769 = vmatprep.subr.mxu0 0.0
        %770 = vmatpush1.msra.mxu0 0.0
        %771 = vmatprep.subr.mxu0 0.0
        %772 = vmatpush1.msra.mxu0 0.0
        %773 = vmatprep.subr.mxu0 0.0
        %774 = vmatpush1.msra.mxu0 0.0
        %775 = vmatprep.subr.mxu0 0.0
        %776 = vmatpush1.msra.mxu0 0.0
        %777 = vmatprep.subr.mxu0 0.0
        %778 = vmatpush1.msra.mxu0 0.0
        %779 = vmatprep.subr.mxu0 0.0
        %780 = vmatpush1.msra.mxu0 0.0
        %781 = vmatprep.subr.mxu0 0.0
        %782 = vmatpush1.msra.mxu0 0.0
        %783 = vmatprep.subr.mxu0 0.0
        %784 = vmatpush1.msra.mxu0 0.0
        %785 = vmatprep.subr.mxu0 0.0
        %786 = vmatpush1.msra.mxu0 0.0
        %787 = vmatprep.mubr.f32.mxu0 0.0
        %788 = vmatmul.mubr.f32.gmra.mrb[0].mxu0 %v515
        %v789 = vpop.f32.mrb[0].mxu0
        %v790 = vadd.f32 0.0, %v789
        %v791 = vpop.f32.mrb[0].mxu0
        %792 = vmatprep.mubr.f32.mxu0 0.0
        %793 = vmatmul.mubr.f32.gmra.mrb[0].mxu0 %v520
        %v794 = vpop.f32.mrb[0].mxu0
        %v795 = vadd.f32 0.0, %v794
        %v796 = vpop.f32.mrb[0].mxu0
        %797 = vdwg.mxu0
        %798 = vmatprep.subr.mxu0 0.0
        %799 = vmatpush1.msra.mxu0 %v691
        %800 = vmatprep.subr.mxu0 0.0
        %801 = vmatpush1.msra.mxu0 %v692
        %802 = vmatprep.subr.mxu0 0.0
        %803 = vmatpush1.msra.mxu0 %v693
        %804 = vmatprep.subr.mxu0 0.0
        %805 = vmatpush1.msra.mxu0 %v694
        %806 = vmatprep.subr.mxu0 0.0
        %807 = vmatpush1.msra.mxu0 %v695
        %808 = vmatprep.subr.mxu0 0.0
        %809 = vmatpush1.msra.mxu0 %v696
        %810 = vmatprep.subr.mxu0 0.0
        %811 = vmatpush1.msra.mxu0 %v697
        %812 = vmatprep.subr.mxu0 0.0
        %813 = vmatpush1.msra.mxu0 %v698
        %814 = vmatprep.subr.mxu0 0.0
        %815 = vmatpush1.msra.mxu0 %v699
        %816 = vmatprep.subr.mxu0 0.0
        %817 = vmatpush1.msra.mxu0 %v700
        %818 = vmatprep.subr.mxu0 0.0
        %819 = vmatpush1.msra.mxu0 %v701
        %820 = vmatprep.subr.mxu0 0.0
        %821 = vmatpush1.msra.mxu0 %v702
        %822 = vmatprep.subr.mxu0 0.0
        %823 = vmatpush1.msra.mxu0 %v703
        %824 = vmatprep.subr.mxu0 0.0
        %825 = vmatpush1.msra.mxu0 %v704
        %826 = vmatprep.subr.mxu0 0.0
        %827 = vmatpush1.msra.mxu0 %v705
        %828 = vmatprep.subr.mxu0 0.0
        %829 = vmatpush1.msra.mxu0 %v706
        %830 = vmatprep.subr.mxu0 0.0
        %831 = vmatpush1.msra.mxu0 0.0
        %832 = vmatprep.subr.mxu0 0.0
        %833 = vmatpush1.msra.mxu0 0.0
        %834 = vmatprep.subr.mxu0 0.0
        %835 = vmatpush1.msra.mxu0 0.0
        %836 = vmatprep.subr.mxu0 0.0
        %837 = vmatpush1.msra.mxu0 0.0
        %838 = vmatprep.subr.mxu0 0.0
        %839 = vmatpush1.msra.mxu0 0.0
        %840 = vmatprep.subr.mxu0 0.0
        %841 = vmatpush1.msra.mxu0 0.0
        %842 = vmatprep.subr.mxu0 0.0
        %843 = vmatpush1.msra.mxu0 0.0
        %844 = vmatprep.subr.mxu0 0.0
        %845 = vmatpush1.msra.mxu0 0.0
        %846 = vmatprep.subr.mxu0 0.0
        %847 = vmatpush1.msra.mxu0 0.0
        %848 = vmatprep.subr.mxu0 0.0
        %849 = vmatpush1.msra.mxu0 0.0
        %850 = vmatprep.subr.mxu0 0.0
        %851 = vmatpush1.msra.mxu0 0.0
        %852 = vmatprep.subr.mxu0 0.0
        %853 = vmatpush1.msra.mxu0 0.0
        %854 = vmatprep.subr.mxu0 0.0
        %855 = vmatpush1.msra.mxu0 0.0
        %856 = vmatprep.subr.mxu0 0.0
        %857 = vmatpush1.msra.mxu0 0.0
        %858 = vmatprep.subr.mxu0 0.0
        %859 = vmatpush1.msra.mxu0 0.0
        %860 = vmatprep.subr.mxu0 0.0
        %861 = vmatpush1.msra.mxu0 0.0
        %862 = vmatprep.mubr.f32.mxu0 0.0
        %863 = vmatmul.mubr.f32.gmra.mrb[0].mxu0 %v683
        %v864 = vpop.f32.mrb[0].mxu0
        %v865 = vadd.f32 %v790, %v864
        %v866 = vpop.f32.mrb[0].mxu0
        %867 = vmatprep.mubr.f32.mxu0 0.0
        %868 = vmatmul.mubr.f32.gmra.mrb[0].mxu0 %v688
        %v869 = vpop.f32.mrb[0].mxu0
        %v870 = vadd.f32 %v795, %v869
        %v871 = vpop.f32.mrb[0].mxu0
        %872 = vdwg.mxu0
        %v873 = vld [vmem:[%s5] sm:$0x1]
        %v875 = vlaneseq
        %v876 = vshrl.u32 %v875, 7
        %v877 = vsub.s32 0, %v876
        %v878 = vrot.slane %v873, %v877
        %v880 = vadd.f32 %v865, %v878
        %v881 = vadd.f32 %v870, %v878
        %v882 = vtanh.pop %v880
        %v883 = vtanh.pop %v881
        %884 = vst [vmem:[%s403] sm:$0xff] %v882
        %885 = vst [vmem:[%s403 + $0x8] sm:$0xff] %v883
        %886 = vst [vmem:[%s410] sm:$0xff] %v613
        %887 = vst [vmem:[%s410 + $0x8] sm:$0xff] %v615
        %s888 = sand.u32 %s192, 1
        %s889 = scalar_lea.sflag [#allocation4], %s888
        %s890 = sand.u32 %s192, 1
        %s891 = smul.addr %s890, 16
        %s892 = scalar_lea.vmem [#allocation11], %s891
        %s893 = sand.u32 %s220, 1
        %s894 = scalar_lea.sflag [#allocation13], %s893
        %s895 = sand.u32 %s220, 1
        %s896 = smul.addr %s895, 16
        %s897 = scalar_lea.vmem [#allocation12], %s896
        // Predicated region
        $region65: #{tpu_custom_call.1} parent=43 // pred_check
          %p898 = pneg %p202
        $region66: #{tpu_custom_call.1} parent=43 // pred_check_branch
          %900 = sbr.rel (%p898) target = $region68
        $region67: #{tpu_custom_call.1} parent=43 // pred_region
          %s901 = smul.u32 2, %s37
          %s903 = ssub.s32 256, 256
          %904 = vsyncadd %s889, %s903
          %s905 = smul.addr %s36, 2
          %s906 = sadd.s32 %s901, %s905
          %s907 = smul.addr %s906, 128
          %s908 = scalar_lea.hbm %s6, %s907
          %s909 = sshll.u32 %s892, 4
          %s910 = int_to_ptr.vmem [resolvable:$true] %s909
          %915 = dma.vmem_to_hbm [thread:$0]  %s910, 256, %s908, %s889, 128, 128, 8
        $region68: #{tpu_custom_call.1} parent=43 // pred_fallthru
          _
        // Predicated region
        $region69: #{tpu_custom_call.1} parent=43 // pred_check
          %p916 = pneg %p230
        $region70: #{tpu_custom_call.1} parent=43 // pred_check_branch
          %918 = sbr.rel (%p916) target = $region72
        $region71: #{tpu_custom_call.1} parent=43 // pred_region
          %s919 = smul.u32 2, %s37
          %s921 = ssub.s32 256, 256
          %922 = vsyncadd %s894, %s921
          %s923 = smul.addr %s36, 2
          %s924 = sadd.s32 %s919, %s923
          %s925 = smul.addr %s924, 128
          %s926 = scalar_lea.hbm %s7, %s925
          %s927 = sshll.u32 %s897, 4
          %s928 = int_to_ptr.vmem [resolvable:$true] %s927
          %933 = dma.vmem_to_hbm [thread:$0]  %s928, 256, %s926, %s894, 128, 128, 8
        $region72: #{tpu_custom_call.1} parent=43 // pred_fallthru
          _
      $region44: #{tpu_custom_call.1} parent=5 // pred_fallthru
        _
      %p934 = scmp.le.s32.totalorder 2, %s27
      // Predicated region
      $region73: #{tpu_custom_call.1} parent=5 // pred_check
        %p935 = pneg %p934
      $region74: #{tpu_custom_call.1} parent=5 // pred_check_branch
        %937 = sbr.rel (%p935) target = $region76
      $region75: #{tpu_custom_call.1} parent=5 // pred_region
        %s938 = ssub.s32 %s27, 2
        // Predicated region
        $region77: #{tpu_custom_call.1} parent=75 // pred_check
          %p939 = pneg %p208
        $region78: #{tpu_custom_call.1} parent=75 // pred_check_branch
          %941 = sbr.rel (%p939) target = $region80
        $region79: #{tpu_custom_call.1} parent=75 // pred_region
          %s942 = sand.u32 %s193, 1
          %s943 = scalar_lea.sflag [#allocation4], %s942
          %s944 = sand.u32 %s193, 1
          %s945 = smul.addr %s944, 16
          %s946 = scalar_lea.vmem [#allocation11], %s945
          %947 = dma.done %s943, 256
        $region80: #{tpu_custom_call.1} parent=75 // pred_fallthru
          _
        // Predicated region
        $region81: #{tpu_custom_call.1} parent=75 // pred_check
          %p948 = pneg %p236
        $region82: #{tpu_custom_call.1} parent=75 // pred_check_branch
          %950 = sbr.rel (%p948) target = $region84
        $region83: #{tpu_custom_call.1} parent=75 // pred_region
          %s951 = sand.u32 %s221, 1
          %s952 = scalar_lea.sflag [#allocation13], %s951
          %s953 = sand.u32 %s221, 1
          %s954 = smul.addr %s953, 16
          %s955 = scalar_lea.vmem [#allocation12], %s954
          %956 = dma.done %s952, 256
        $region84: #{tpu_custom_call.1} parent=75 // pred_fallthru
          _
      $region76: #{tpu_custom_call.1} parent=5 // pred_fallthru
        _
    $region6: #{tpu_custom_call.1} parent=1 // loop_footer
      %s31 = sadd.s32 1, %s27
    $region7: #{tpu_custom_call.1} parent=1 // loop_footer_branch
      %26 = sbr.rel target = $region3
    $region8: #{tpu_custom_call.1} parent=1 // loop_exit
      _
    %957 = vsyncpa [#allocation3], 1
    %s958 = scalar_lea.sflag [#allocation3], 1
    %959 = vsyncpa %s958, 1
    %960 = vsyncpa [#allocation6], 1
    %s961 = scalar_lea.sflag [#allocation6], 1
    %962 = vsyncpa %s961, 1
    %963 = vsyncpa [#allocation9], 1
    %964 = vsyncpa [#allocation4], 1
    %s965 = scalar_lea.sflag [#allocation4], 1
    %966 = vsyncpa %s965, 1
    %967 = vsyncpa [#allocation13], 1
    %s968 = scalar_lea.sflag [#allocation13], 1
    %969 = vsyncpa %s968, 1

</llo_original>
